<compile_context>
chip_gen: v5e
topology: v5e:2x2
jax: 0.10.0
libtpu: 0.0.40
codegen_flags: <defaults>
</compile_context>

<pallas_src>
import math

import jax
import jax.numpy as jnp
from jax.experimental import pallas as pl
from jax.experimental.pallas import tpu as pltpu

_LANE = 128
_SUBLANE = 8


def _round_up(a, b):
    return (a + b - 1) // b * b


def _make_reduce_kernel(cols, tn, inv_n, needs_mask):
    n_groups = tn // _LANE
    n_parts = min(4, n_groups)          # independent accumulators -> 4-way ILP

    def kernel(x_ref, o_ref, acc_ref):
        k = pl.program_id(1)

        @pl.when(k == 0)
        def _init():
            acc_ref[...] = jnp.zeros_like(acc_ref)

        row_tile = acc_ref.shape[0]

        # Consume the tile as 128-lane slices from the Ref (static slices are free)
        # and fold them into a few independent (row_tile, 128) f32 partials.
        parts = [jnp.zeros((row_tile, _LANE), jnp.float32) for _ in range(n_parts)]
        for q in range(n_groups):
            chunk = x_ref[:, q * _LANE:(q + 1) * _LANE].astype(jnp.float32)
            if needs_mask:
                # mask the (undefined) out-of-bounds lanes of the boundary tile
                col = (jax.lax.broadcasted_iota(jnp.int32, chunk.shape, 1)
                       + (k * tn + q * _LANE))
                chunk = jnp.where(col < cols, chunk, 0.0)
            parts[q % n_parts] = parts[q % n_parts] + chunk

        total = parts[0]
        for p in parts[1:]:
            total = total + p
        acc_ref[...] += total

        @pl.when(k == pl.num_programs(1) - 1)
        def _finalize():
            # single cross-lane (XLU) reduce + 1/N scale, once per row block
            o_ref[...] = jnp.sum(acc_ref[...], axis=1, keepdims=True) * inv_n

    return kernel


def reduce_forward(x):
    """x: (B, C, H, W) (or any (B, ...)). Returns (B,) per-sample means."""
    B = x.shape[0]
    N = math.prod(x.shape[1:])

    # ---- flatten + fold features into the sublane axis so rows % 8 == 0 ----
    r_min = 8 // math.gcd(B, 8)
    r = r_min if (N % r_min == 0) else 1
    # fold further (powers of 2) while the lane axis stays wide enough
    while (N % (2 * r) == 0) and (N // (2 * r) >= 1024) and (B * 2 * r <= 1024):
        r *= 2
    rows, cols = B * r, N // r
    x2 = x.reshape(rows, cols)          # contiguous row-major reshape: free

    # ---- tile sizes ----
    if rows % _SUBLANE == 0:
        row_tile = _SUBLANE
        while (row_tile * 2 <= min(rows, 512)) and (rows % (row_tile * 2) == 0):
            row_tile *= 2
    else:
        row_tile = rows                 # fallback: full (sublane-padded) row block

    itemsize = jnp.dtype(x.dtype).itemsize
    budget = 2 * 1024 * 1024            # ~2 MiB per input buffer (double-buffered)
    tn = budget // (row_tile * itemsize)
    tn = max(_LANE, min((tn // _LANE) * _LANE,        # multiple of 128 lanes
                        32 * _LANE,                   # cap kernel-body unroll
                        _round_up(cols, _LANE)))

    n_row_blocks = pl.cdiv(rows, row_tile)
    n_col_blocks = pl.cdiv(cols, tn)
    needs_mask = (cols % tn) != 0

    kernel = _make_reduce_kernel(cols, tn, 1.0 / float(N), needs_mask)

    row_partials = pl.pallas_call(
        kernel,
        out_shape=jax.ShapeDtypeStruct((rows, 1), jnp.float32),
        grid=(n_row_blocks, n_col_blocks),
        in_specs=[pl.BlockSpec((row_tile, tn), lambda i, k: (i, k))],
        out_specs=pl.BlockSpec((row_tile, 1), lambda i, k: (i, 0)),
        scratch_shapes=[pltpu.VMEM((row_tile, _LANE), jnp.float32)],
        compiler_params=pltpu.CompilerParams(
            dimension_semantics=("parallel", "arbitrary")),
        cost_estimate=pl.CostEstimate(
            flops=rows * cols,
            transcendentals=0,
            bytes_accessed=rows * cols * itemsize + rows * 4),
    )(x2)

    # combine the r equal-size feature chunks folded into the sublane axis
    out = row_partials[:, 0].reshape(B, r).sum(axis=1)
    return out.astype(x.dtype)


if __name__ == "__main__":
    key = jax.random.PRNGKey(0)

    # primary test: shape implied by the CNN regressor head (B, C, H, W)
    x = jax.random.normal(key, (2, 4, 16, 16), dtype=jnp.float32)
    y = reduce_forward(x)
    jax.block_until_ready(y)
    ref = jnp.mean(x.reshape(x.shape[0], -1), axis=1)
    assert y.shape == (2,)
    assert jnp.allclose(y, ref, atol=1e-5, rtol=1e-5)

    # ragged / unfoldable feature count: exercises the masked boundary-tile path
    x2 = jax.random.normal(jax.random.PRNGKey(1), (2, 3, 5, 7), dtype=jnp.float32)
    y2 = reduce_forward(x2)
    jax.block_until_ready(y2)
    ref2 = jnp.mean(x2.reshape(x2.shape[0], -1), axis=1)
    assert jnp.allclose(y2, ref2, atol=1e-5, rtol=1e-5)

    print("KERNEL_OK")
</pallas_src>

<mosaic_0001>
module attributes {stable_mosaic.version = 11 : i64} {
  func.func @kernel(%arg0: i32, %arg1: i32, %arg2: memref<8x256xf32, #tpu.memory_space<vmem>>, %arg3: memref<8x1xf32, #tpu.memory_space<vmem>>, %arg4: memref<8x128xf32, #tpu.memory_space<vmem>>) attributes {dimension_semantics = [#tpu.dimension_semantics<parallel>, #tpu.dimension_semantics<arbitrary>], iteration_bounds = array<i64: 1, 1>, scalar_prefetch = 0 : i64, scratch_operands = 1 : i64, tpu.core_type = #tpu.core_type<tc>, window_params = [{transform_indices = @transform_0, window_bounds = array<i64: 8, 256>}, {transform_indices = @transform_1, window_bounds = array<i64: 8, 1>}]} {
    %c0_i32 = arith.constant 0 : i32
    %0 = arith.cmpi eq, %arg1, %c0_i32 : i32
    %1 = arith.extui %0 : i1 to i32
    %c0_i32_0 = arith.constant 0 : i32
    %2 = arith.cmpi ne, %1, %c0_i32_0 : i32
    scf.if %2 {
      %cst_10 = arith.constant 0.000000e+00 : f32
      %16 = vector.broadcast %cst_10 : f32 to vector<8x128xf32>
      %c0_11 = arith.constant 0 : index
      %c0_12 = arith.constant 0 : index
      %17 = vector.load %arg4[%c0_11, %c0_12] : memref<8x128xf32, #tpu.memory_space<vmem>>, vector<8x128xf32>
      tpu.vector_store %arg4[%c0_11, %c0_12], %16 {strides = array<i32>} : memref<8x128xf32, #tpu.memory_space<vmem>>, vector<8x128xf32>,
    } else {
    }
    %cst = arith.constant 0.000000e+00 : f32
    %3 = vector.broadcast %cst : f32 to vector<8x128xf32>
    %cst_1 = arith.constant 0.000000e+00 : f32
    %4 = vector.broadcast %cst_1 : f32 to vector<8x128xf32>
    %c0 = arith.constant 0 : index
    %c0_2 = arith.constant 0 : index
    %5 = vector.load %arg2[%c0, %c0_2] : memref<8x256xf32, #tpu.memory_space<vmem>>, vector<8x128xf32>
    %6 = arith.addf %3, %5 : vector<8x128xf32>
    %c0_3 = arith.constant 0 : index
    %c128 = arith.constant 128 : index
    %7 = vector.load %arg2[%c0_3, %c128] : memref<8x256xf32, #tpu.memory_space<vmem>>, vector<8x128xf32>
    %8 = arith.addf %4, %7 : vector<8x128xf32>
    %9 = arith.addf %6, %8 : vector<8x128xf32>
    %c0_4 = arith.constant 0 : index
    %c0_5 = arith.constant 0 : index
    %10 = vector.load %arg4[%c0_4, %c0_5] : memref<8x128xf32, #tpu.memory_space<vmem>>, vector<8x128xf32>
    %11 = arith.addf %10, %9 : vector<8x128xf32>
    %c0_6 = arith.constant 0 : index
    %c0_7 = arith.constant 0 : index
    %12 = vector.load %arg4[%c0_6, %c0_7] : memref<8x128xf32, #tpu.memory_space<vmem>>, vector<8x128xf32>
    tpu.vector_store %arg4[%c0_6, %c0_7], %11 {strides = array<i32>} : memref<8x128xf32, #tpu.memory_space<vmem>>, vector<8x128xf32>,
    %c0_i32_8 = arith.constant 0 : i32
    %13 = arith.cmpi eq, %arg1, %c0_i32_8 : i32
    %14 = arith.extui %13 : i1 to i32
    %c0_i32_9 = arith.constant 0 : i32
    %15 = arith.cmpi ne, %14, %c0_i32_9 : i32
    scf.if %15 {
      %c0_10 = arith.constant 0 : index
      %c0_11 = arith.constant 0 : index
      %16 = vector.load %arg4[%c0_10, %c0_11] : memref<8x128xf32, #tpu.memory_space<vmem>>, vector<8x128xf32>
      %cst_12 = arith.constant dense<0.000000e+00> : vector<8xf32>
      %17 = vector.multi_reduction <add>, %16, %cst_12 [1] : vector<8x128xf32> to vector<8xf32>
      %18 = vector.shape_cast %17 : vector<8xf32> to vector<8x1xf32>
      %cst_13 = arith.constant 9.765625E-4 : f32
      %19 = vector.broadcast %cst_13 : f32 to vector<8x1xf32>
      %20 = arith.mulf %18, %19 : vector<8x1xf32>
      %c0_14 = arith.constant 0 : index
      %c0_15 = arith.constant 0 : index
      %21 = vector.load %arg3[%c0_14, %c0_15] : memref<8x1xf32, #tpu.memory_space<vmem>>, vector<8x1xf32>
      tpu.vector_store %arg3[%c0_14, %c0_15], %20 {strides = array<i32>} : memref<8x1xf32, #tpu.memory_space<vmem>>, vector<8x1xf32>,
    } else {
    }
    return
  }
  func.func @transform_0(%arg0: i32, %arg1: i32) -> (i32, i32) {
    %c0_i32 = arith.constant 0 : i32
    return %arg0, %arg1 : i32, i32
  }
  func.func @transform_1(%arg0: i32, %arg1: i32) -> (i32, i32) {
    %c0_i32 = arith.constant 0 : i32
    %c0_i32_0 = arith.constant 0 : i32
    return %arg0, %c0_i32 : i32, i32
  }
}

</mosaic_0001>

<llo_original>
// kernel: tpu_custom_call.1
$region0: #{tpu_custom_call.1}
  #allocation0 [shape = 'u32[]', space=smem, size = 0x4, offset = 0x4, fixed_abs, tag = 'smem constant byte address 0x4 - core index']
  #allocation1 [shape = 'u32[72,128]{1,0:T(1,128)}', space=vmem, size = 0x9000, scoped, tag = 'internal scratch']
  #allocation2 [shape = 'f32[8,128]{1,0:T(8,128)}', space=vmem, size = 0x1000, scoped, tag = 'scratch operand']
  %s0 = inlined_call_operand.hbm [shape: f32[8,256], index: 0, kind: input, shape index: {}]
  %s1 = inlined_call_operand.vmem [shape: f32[8,1], index: 1, kind: output, shape index: {}]
  %s2 = sld [smem:[#allocation0]]
  $region26: #{tpu_custom_call.1} parent=0
    _
  %s4 = ssub.s32 1, %s2
  %s5 = scalar_select 0, %s4, %s2
  $region1: #{tpu_custom_call.1} parent=0
    #allocation3 [shape = 'u8[8192]{0}', space=vmem, size = 0x2000, scoped, tag = 'input window, operand 0, single buffered']
    #allocation4 [shape = 's32[1]{0}', space=sflag, size = 0x4, scoped, tag = 'scoped memory for tpu_custom_call.1']
    %6 = vsyncpa [#allocation4], 0
    // Predicated region
    $region2: #{tpu_custom_call.1} parent=1 // pred_check
      _
    $region3: #{tpu_custom_call.1} parent=1 // pred_check_branch
      %8 = sbr.rel (0) target = $region5
    $region4: #{tpu_custom_call.1} parent=1 // pred_region
      %10 = vsyncadd [#allocation4], 0
      %s12 = sshll.u32 %s0, 4
      %s13 = int_to_ptr.hbm [resolvable:$true] %s12
      %s14 = sshll.u32 [#allocation3], 4
      %s15 = int_to_ptr.vmem [resolvable:$true] %s14
      %17 = dma.hbm_to_vmem [thread:$0]  %s13, 256, %s15, [#allocation4]
    $region5: #{tpu_custom_call.1} parent=1 // pred_fallthru
      _
    // Predicated region
    $region6: #{tpu_custom_call.1} parent=1 // pred_check
      _
    $region7: #{tpu_custom_call.1} parent=1 // pred_check_branch
      %19 = sbr.rel (0) target = $region9
    $region8: #{tpu_custom_call.1} parent=1 // pred_region
      %21 = dma.done [#allocation4], 256
    $region9: #{tpu_custom_call.1} parent=1 // pred_fallthru
      _
    %p22 = scmp.eq.s32.totalorder 0, 0
    // Predicated region
    $region10: #{tpu_custom_call.1} parent=1 // pred_check
      %p23 = pneg %p22
    $region11: #{tpu_custom_call.1} parent=1 // pred_check_branch
      %25 = sbr.rel (%p23) target = $region13
    $region12: #{tpu_custom_call.1} parent=1 // pred_region
      %26 = vst [vmem:[#allocation2] sm:$0xff] 0.0
    $region13: #{tpu_custom_call.1} parent=1 // pred_fallthru
      _
    %v27 = vld [vmem:[#allocation3] sm:$0xff]
    %v28 = vadd.f32 %v27, 0.0
    %v29 = vld [vmem:[#allocation3 + $0x8] sm:$0xff]
    %v30 = vadd.f32 %v29, 0.0
    %v31 = vadd.f32 %v28, %v30
    %v32 = vld [vmem:[#allocation2] sm:$0xff]
    %v33 = vadd.f32 %v32, %v31
    %34 = vst [vmem:[#allocation2] sm:$0xff] %v33
    // Predicated region
    $region14: #{tpu_custom_call.1} parent=1 // pred_check
      %p35 = pneg %p22
    $region15: #{tpu_custom_call.1} parent=1 // pred_check_branch
      %37 = sbr.rel (%p35) target = $region17
    $region16: #{tpu_custom_call.1} parent=1 // pred_region
      %v38 = vld [vmem:[#allocation2] sm:$0xff]
      %39 = vadd.xlane.f32.xlu0 %v38
      %v40 = vpop.xlane.xlu0 %39
      %v41 = vmul.f32 %v40, 0.0009765625
      %vm42 = vcmask 7168
      %43 = vst.msk [vmem:[%s1] sm:$0xff] %vm42, %v41
    $region17: #{tpu_custom_call.1} parent=1 // pred_fallthru
      _
    // Predicated region
    $region18: #{tpu_custom_call.1} parent=1 // pred_check
      _
    $region19: #{tpu_custom_call.1} parent=1 // pred_check_branch
      %45 = sbr.rel (0) target = $region21
    $region20: #{tpu_custom_call.1} parent=1 // pred_region
      _
    $region21: #{tpu_custom_call.1} parent=1 // pred_fallthru
      _
    // Predicated region
    $region22: #{tpu_custom_call.1} parent=1 // pred_check
      _
    $region23: #{tpu_custom_call.1} parent=1 // pred_check_branch
      %47 = sbr.rel (0) target = $region25
    $region24: #{tpu_custom_call.1} parent=1 // pred_region
      _
    $region25: #{tpu_custom_call.1} parent=1 // pred_fallthru
      _
    %48 = vsyncpa [#allocation4], 1

</llo_original>
